<compile_context>
chip_gen: v7x
topology: tpu7x:2x2x1
jax: 0.10.0
libtpu: 0.0.40
codegen_flags: <defaults>
</compile_context>

<pallas_src>
import functools

import jax
import jax.numpy as jnp
from jax.experimental import pallas as pl
from jax.experimental.pallas import tpu as pltpu

_MIB = 1 << 20
_LANES = 128


# ---------------------------------------------------------------------------
# Kernel: LayerNorm over the last axis of a (tm, Ep) row tile
# ---------------------------------------------------------------------------
def _layernorm_kernel(x_ref, g_ref, b_ref, o_ref, *, eps, n_feat, n_pad, fused_stats):
    # x_ref: (tm, Ep) activation tile; g_ref/b_ref: (1, Ep); o_ref: (tm, Ep)
    x = x_ref[...].astype(jnp.float32)
    inv_n = 1.0 / n_feat
    inv_nm1 = 1.0 / max(n_feat - 1, 1)  # torch.var default: unbiased (N-1)

    if fused_stats:
        # Single pass over the lanes: s1 = sum(x), s2 = sum(x*x) (v7x option).
        # Padded lanes are zero in HBM, so both sums are exact.
        s1 = jnp.sum(x, axis=-1, keepdims=True)
        s2 = jnp.sum(x * x, axis=-1, keepdims=True)
        mean = s1 * inv_n
        var = jnp.maximum((s2 - s1 * mean) * inv_nm1, 0.0)
        xc = x - mean
    else:
        mean = jnp.sum(x, axis=-1, keepdims=True) * inv_n
        xc = x - mean
        if n_pad > n_feat:
            # Padded lanes would contribute mean^2 to the variance: mask them.
            lane = jax.lax.broadcasted_iota(jnp.int32, x.shape, dimension=1)
            xc = jnp.where(lane < n_feat, xc, 0.0)
        var = jnp.sum(xc * xc, axis=-1, keepdims=True) * inv_nm1

    inv = jax.lax.rsqrt(var + eps)  # EUP rsqrt, keeps VALU slots free
    y = xc * inv * g_ref[...] + b_ref[...]
    o_ref[...] = y.astype(o_ref.dtype)


# ---------------------------------------------------------------------------
# Tiling policy
# ---------------------------------------------------------------------------
def _vmem_capacity_bytes():
    try:
        return int(pltpu.get_tpu_info().vmem_capacity_bytes)
    except Exception:
        return 64 * _MIB  # conservative fallback (v7x physical VMEM)


def _sublane_multiple(dtype):
    # Sublane packing: 8 for 32-bit, 16 for bf16, 32 for int8/fp8.
    return max(8, 32 // jnp.dtype(dtype).itemsize)


def _pick_block_rows(num_rows, padded_cols, itemsize, *, tile_budget_bytes,
                     target_block_bytes=4 * _MIB, min_grid_steps=8, sublane=8):
    row_bytes = padded_cols * itemsize
    # Bytes-driven target tile (amortizes the ~0.35 us per-grid-step overhead).
    tm = max(1, target_block_bytes // row_bytes)
    # Input + output, each double-buffered by the pipeline -> 4 live tiles.
    tm = min(tm, max(1, tile_budget_bytes // (4 * row_bytes)))
    # Keep at least min_grid_steps so both v7x TensorCores get work.
    tm = min(tm, max(1, pl.cdiv(num_rows, min_grid_steps)))
    # Align down to the dtype's sublane packing.
    tm = max(sublane, (tm // sublane) * sublane)
    if tm >= num_rows:
        return num_rows  # single full-extent block (always a legal block shape)
    return tm


# ---------------------------------------------------------------------------
# Wrapper: LayerNorm over the last axis of x (any leading dims, e.g. (m, T, E))
# ---------------------------------------------------------------------------
def layer_norm(x, gamma, beta, eps=1e-5, *, fused_stats=False):
    orig_shape = x.shape
    E = orig_shape[-1]
    R = 1
    for d in orig_shape[:-1]:
        R *= d

    # Lane-dense last dim: pad E up to a multiple of 128 (zeros, masked in-kernel).
    Ep = ((E + _LANES - 1) // _LANES) * _LANES
    x2 = x.reshape(R, E)
    g2 = gamma.reshape(1, E).astype(jnp.float32)
    b2 = beta.reshape(1, E).astype(jnp.float32)
    if Ep != E:
        x2 = jnp.pad(x2, ((0, 0), (0, Ep - E)))
        g2 = jnp.pad(g2, ((0, 0), (0, Ep - E)))
        b2 = jnp.pad(b2, ((0, 0), (0, Ep - E)))

    itemsize = jnp.dtype(x.dtype).itemsize
    vmem_cap = _vmem_capacity_bytes()                          # 128 MiB v5e/v6e, 64 MiB v7x
    vmem_limit = int(min(100 * _MIB, (vmem_cap * 3) // 4))     # ~96-100 MiB v5e/v6e, ~48 MiB v7x
    tile_budget = vmem_limit - 4 * _MIB                        # headroom: gamma/beta, scratch

    tm = _pick_block_rows(R, Ep, itemsize,
                          tile_budget_bytes=tile_budget,
                          sublane=_sublane_multiple(x.dtype))
    grid = (pl.cdiv(R, tm),)

    kernel = functools.partial(_layernorm_kernel, eps=float(eps),
                               n_feat=E, n_pad=Ep, fused_stats=fused_stats)

    cost = pl.CostEstimate(
        flops=5 * R * E,                 # mean, center, square, scale, affine
        transcendentals=R,               # one rsqrt per row
        bytes_accessed=2 * R * E * itemsize + 2 * E * 4,
    )

    out = pl.pallas_call(
        kernel,
        out_shape=jax.ShapeDtypeStruct((R, Ep), x.dtype),
        grid=grid,
        in_specs=[
            pl.BlockSpec((tm, Ep), lambda i: (i, 0)),   # activation row tile
            pl.BlockSpec((1, Ep), lambda i: (0, 0)),    # gamma (resident)
            pl.BlockSpec((1, Ep), lambda i: (0, 0)),    # beta  (resident)
        ],
        out_specs=pl.BlockSpec((tm, Ep), lambda i: (i, 0)),
        compiler_params=pltpu.CompilerParams(
            dimension_semantics=("parallel",),          # rows independent -> megacore split
            vmem_limit_bytes=vmem_limit,
        ),
        cost_estimate=cost,
    )(x2, g2, b2)

    if Ep != E:
        out = out[:, :E]
    return out.reshape(orig_shape)


# ---------------------------------------------------------------------------
# Pure-JAX reference (mirrors the PyTorch forward, incl. unbiased variance)
# ---------------------------------------------------------------------------
def reference_layer_norm(x, gamma, beta, eps=1e-5):
    mean = jnp.mean(x, axis=-1, keepdims=True)
    var = jnp.var(x, axis=-1, keepdims=True, ddof=1)
    return (x - mean) / jnp.sqrt(var + eps) * gamma + beta


if __name__ == "__main__":
    key = jax.random.PRNGKey(0)
    m, T, emb_dim = 4, 128, 256  # small, lane-/sublane-aligned transformer shapes

    kx, kg, kb = jax.random.split(key, 3)
    x = jax.random.normal(kx, (m, T, emb_dim), jnp.float32)
    # PyTorch init is gamma=ones, beta=zeros; perturb so the affine path is exercised.
    gamma = 1.0 + 0.1 * jax.random.normal(kg, (emb_dim,), jnp.float32)
    beta = 0.1 * jax.random.normal(kb, (emb_dim,), jnp.float32)

    y = layer_norm(x, gamma, beta, eps=1e-5)
    jax.block_until_ready(y)
    y_ref = reference_layer_norm(x, gamma, beta, eps=1e-5)
    assert y.shape == x.shape
    assert jnp.allclose(y, y_ref, atol=1e-4, rtol=1e-4)

    # Unaligned path: E not a multiple of 128, rows not a multiple of the tile
    # (exercises lane padding + masked variance + cdiv partial last block).
    k2x, k2g, k2b = jax.random.split(jax.random.PRNGKey(1), 3)
    x_odd = jax.random.normal(k2x, (3, 10, 96), jnp.float32)
    g_odd = 1.0 + 0.1 * jax.random.normal(k2g, (96,), jnp.float32)
    b_odd = 0.1 * jax.random.normal(k2b, (96,), jnp.float32)
    y_odd = layer_norm(x_odd, g_odd, b_odd, eps=1e-5)
    jax.block_until_ready(y_odd)
    assert jnp.allclose(y_odd, reference_layer_norm(x_odd, g_odd, b_odd, eps=1e-5),
                        atol=1e-4, rtol=1e-4)

    print("KERNEL_OK")
</pallas_src>

<mosaic_0001>
module attributes {stable_mosaic.version = 11 : i64} {
  func.func @_layernorm_kernel(%arg0: i32, %arg1: memref<64x256xf32, #tpu.memory_space<vmem>>, %arg2: memref<1x256xf32, #tpu.memory_space<vmem>>, %arg3: memref<1x256xf32, #tpu.memory_space<vmem>>, %arg4: memref<64x256xf32, #tpu.memory_space<vmem>>) attributes {dimension_semantics = [#tpu.dimension_semantics<parallel>], iteration_bounds = array<i64: 8>, scalar_prefetch = 0 : i64, scratch_operands = 0 : i64, tpu.core_type = #tpu.core_type<tc>, window_params = [{transform_indices = @transform_0, window_bounds = array<i64: 64, 256>}, {pipeline_mode = #tpu.pipeline_mode<synchronous>, transform_indices = @transform_1, window_bounds = array<i64: 1, 256>}, {pipeline_mode = #tpu.pipeline_mode<synchronous>, transform_indices = @transform_2, window_bounds = array<i64: 1, 256>}, {transform_indices = @transform_3, window_bounds = array<i64: 64, 256>}]} {
    %c0 = arith.constant 0 : index
    %c0_0 = arith.constant 0 : index
    %0 = vector.load %arg1[%c0, %c0_0] : memref<64x256xf32, #tpu.memory_space<vmem>>, vector<64x256xf32>
    %cst = arith.constant dense<0.000000e+00> : vector<64xf32>
    %1 = vector.multi_reduction <add>, %0, %cst [1] : vector<64x256xf32> to vector<64xf32>
    %2 = vector.shape_cast %1 : vector<64xf32> to vector<64x1xf32>
    %cst_1 = arith.constant 3.906250e-03 : f32
    %3 = vector.broadcast %cst_1 : f32 to vector<64x1xf32>
    %4 = arith.mulf %2, %3 : vector<64x1xf32>
    %5 = vector.broadcast %4 : vector<64x1xf32> to vector<64x256xf32>
    %6 = arith.subf %0, %5 : vector<64x256xf32>
    %7 = arith.mulf %6, %6 : vector<64x256xf32>
    %cst_2 = arith.constant dense<0.000000e+00> : vector<64xf32>
    %8 = vector.multi_reduction <add>, %7, %cst_2 [1] : vector<64x256xf32> to vector<64xf32>
    %9 = vector.shape_cast %8 : vector<64xf32> to vector<64x1xf32>
    %cst_3 = arith.constant 0.00392156886 : f32
    %10 = vector.broadcast %cst_3 : f32 to vector<64x1xf32>
    %11 = arith.mulf %9, %10 : vector<64x1xf32>
    %cst_4 = arith.constant 9.99999974E-6 : f32
    %12 = vector.broadcast %cst_4 : f32 to vector<64x1xf32>
    %13 = arith.addf %11, %12 : vector<64x1xf32>
    %14 = math.rsqrt %13 : vector<64x1xf32>
    %15 = vector.broadcast %14 : vector<64x1xf32> to vector<64x256xf32>
    %16 = arith.mulf %6, %15 : vector<64x256xf32>
    %c0_5 = arith.constant 0 : index
    %c0_6 = arith.constant 0 : index
    %17 = vector.load %arg2[%c0_5, %c0_6] : memref<1x256xf32, #tpu.memory_space<vmem>>, vector<1x256xf32>
    %18 = vector.broadcast %17 : vector<1x256xf32> to vector<64x256xf32>
    %19 = arith.mulf %16, %18 : vector<64x256xf32>
    %c0_7 = arith.constant 0 : index
    %c0_8 = arith.constant 0 : index
    %20 = vector.load %arg3[%c0_7, %c0_8] : memref<1x256xf32, #tpu.memory_space<vmem>>, vector<1x256xf32>
    %21 = vector.broadcast %20 : vector<1x256xf32> to vector<64x256xf32>
    %22 = arith.addf %19, %21 : vector<64x256xf32>
    %c0_9 = arith.constant 0 : index
    %c0_10 = arith.constant 0 : index
    %23 = vector.load %arg4[%c0_9, %c0_10] : memref<64x256xf32, #tpu.memory_space<vmem>>, vector<64x256xf32>
    tpu.vector_store %arg4[%c0_9, %c0_10], %22 {strides = array<i32>} : memref<64x256xf32, #tpu.memory_space<vmem>>, vector<64x256xf32>,
    return
  }
  func.func @transform_0(%arg0: i32) -> (i32, i32) {
    %c0_i32 = arith.constant 0 : i32
    %c0_i32_0 = arith.constant 0 : i32
    return %arg0, %c0_i32 : i32, i32
  }
  func.func @transform_1(%arg0: i32) -> (i32, i32) {
    %c0_i32 = arith.constant 0 : i32
    %c0_i32_0 = arith.constant 0 : i32
    %c0_i32_1 = arith.constant 0 : i32
    return %c0_i32, %c0_i32_0 : i32, i32
  }
  func.func @transform_2(%arg0: i32) -> (i32, i32) {
    %c0_i32 = arith.constant 0 : i32
    %c0_i32_0 = arith.constant 0 : i32
    %c0_i32_1 = arith.constant 0 : i32
    return %c0_i32, %c0_i32_0 : i32, i32
  }
  func.func @transform_3(%arg0: i32) -> (i32, i32) {
    %c0_i32 = arith.constant 0 : i32
    %c0_i32_0 = arith.constant 0 : i32
    return %arg0, %c0_i32 : i32, i32
  }
}

</mosaic_0001>

<llo_original>
// kernel: tpu_custom_call.1
$region0: #{tpu_custom_call.1}
  #allocation0 [shape = 'u32[]', space=smem, size = 0x4, offset = 0x4, fixed_abs, tag = 'smem constant byte address 0x4 - core index']
  #allocation1 [shape = 'u32[144,128]{1,0:T(1,128)}', space=vmem, size = 0x12000, scoped, tag = 'internal scratch']
  %s0 = inlined_call_operand.hbm [shape: f32[512,256], index: 0, kind: input, shape index: {}]
  %s1 = inlined_call_operand.vmem [shape: f32[1,256], index: 1, kind: input, shape index: {}]
  %s2 = inlined_call_operand.vmem [shape: f32[1,256], index: 2, kind: input, shape index: {}]
  %s3 = inlined_call_operand.hbm [shape: f32[512,256], index: 3, kind: output, shape index: {}]
  %s4 = sld [smem:[#allocation0]]
  $region49: #{tpu_custom_call.1} parent=0
    _
  %s6 = ssub.s32 1, %s4
  %s7 = scalar_select 0, %s6, %s4
  $region1: #{tpu_custom_call.1} parent=0
    #allocation2 [shape = 'u8[131072]{0}', space=vmem, size = 0x20000, scoped, tag = 'input window, operand 0']
    #allocation3 [shape = 's32[2]{0}', space=sflag, size = 0x8, scoped, tag = 'scoped memory for tpu_custom_call.1']
    #allocation4 [shape = 's32[2]{0}', space=sflag, size = 0x8, scoped, tag = 'scoped memory for tpu_custom_call.1']
    #allocation5 [shape = 'u8[131072]{0}', space=vmem, size = 0x20000, scoped, tag = 'output window, operand 0']
    %8 = vsyncpa [#allocation3], 0
    %s9 = scalar_lea.sflag [#allocation3], 1
    %10 = vsyncpa %s9, 0
    %11 = vsyncpa [#allocation4], 0
    %s12 = scalar_lea.sflag [#allocation4], 1
    %13 = vsyncpa %s12, 0
    loop: start=0, step=1, limit=10
    $region2: #{tpu_custom_call.1} parent=1 // loop_pre_header
      _
    $region3: #{tpu_custom_call.1} parent=1 // loop_header
      %s15 = sphi 0, %s19
      %p16 = scmp.ge.s32.totalorder %s15, 10
      %s25 = sphi 0, %s27
      %s28 = sphi 0, %s25
      %s29 = sphi 0, %s28
      %s45 = sphi 0, %s29
      %s49 = sphi 0, %s49
      %s51 = sphi 0, %s49
      %s52 = sphi 0, %s51
      %s66 = sphi 0, %s52
      %s70 = sphi 0, %s70
      %s72 = sphi 0, %s70
      %s73 = sphi 0, %s72
      %s87 = sphi 0, %s73
      %s93 = sphi 0, %s95
      %s96 = sphi 0, %s93
      %s97 = sphi 0, %s96
      %s113 = sphi 0, %s97
    $region4: #{tpu_custom_call.1} parent=1 // loop_header_branch
      %18 = sbr.rel (%p16) target = $region8
    $region5: #{tpu_custom_call.1} parent=1 // loop_body
      %s20 = ssub.s32 %s15, 1
      %s21 = ssub.s32 %s15, 2
      %s22 = sadd.s32 %s15, 1
      %s23 = ssub.s32 %s15, %s22
      %p24 = scmp.eq.s32.totalorder %s23, 0
      %s26 = sadd.s32 %s25, 1
      %s27 = scalar_select %p24, %s25, %s26
      %p30 = pneg %p24
      %p31 = scmp.eq.s32.totalorder %s15, 7
      %p32 = por %p30, %p31
      %p33 = scmp.ne.s32.totalorder %s25, %s28
      %p34 = scmp.eq.s32.totalorder %s15, 0
      %p35 = por %p33, %p34
      %p36 = scmp.ne.s32.totalorder %s25, %s28
      %p37 = scmp.eq.s32.totalorder %s20, 7
      %p38 = por %p36, %p37
      %p39 = scmp.ne.s32.totalorder %s28, %s29
      %p40 = scmp.eq.s32.totalorder %s20, 0
      %p41 = por %p39, %p40
      %p42 = scmp.ne.s32.totalorder %s28, %s29
      %p43 = scmp.eq.s32.totalorder %s21, 7
      %p44 = por %p42, %p43
      %p46 = scmp.ne.s32.totalorder %s29, %s45
      %p47 = scmp.eq.s32.totalorder %s21, 0
      %p48 = por %p46, %p47
      %s50 = sadd.s32 %s49, 1
      %p53 = scmp.eq.s32.totalorder %s15, 7
      %p54 = scmp.ne.s32.totalorder %s49, %s51
      %p55 = scmp.eq.s32.totalorder %s15, 0
      %p56 = por %p54, %p55
      %p57 = scmp.ne.s32.totalorder %s49, %s51
      %p58 = scmp.eq.s32.totalorder %s20, 7
      %p59 = por %p57, %p58
      %p60 = scmp.ne.s32.totalorder %s51, %s52
      %p61 = scmp.eq.s32.totalorder %s20, 0
      %p62 = por %p60, %p61
      %p63 = scmp.ne.s32.totalorder %s51, %s52
      %p64 = scmp.eq.s32.totalorder %s21, 7
      %p65 = por %p63, %p64
      %p67 = scmp.ne.s32.totalorder %s52, %s66
      %p68 = scmp.eq.s32.totalorder %s21, 0
      %p69 = por %p67, %p68
      %s71 = sadd.s32 %s70, 1
      %p74 = scmp.eq.s32.totalorder %s15, 7
      %p75 = scmp.ne.s32.totalorder %s70, %s72
      %p76 = scmp.eq.s32.totalorder %s15, 0
      %p77 = por %p75, %p76
      %p78 = scmp.ne.s32.totalorder %s70, %s72
      %p79 = scmp.eq.s32.totalorder %s20, 7
      %p80 = por %p78, %p79
      %p81 = scmp.ne.s32.totalorder %s72, %s73
      %p82 = scmp.eq.s32.totalorder %s20, 0
      %p83 = por %p81, %p82
      %p84 = scmp.ne.s32.totalorder %s72, %s73
      %p85 = scmp.eq.s32.totalorder %s21, 7
      %p86 = por %p84, %p85
      %p88 = scmp.ne.s32.totalorder %s73, %s87
      %p89 = scmp.eq.s32.totalorder %s21, 0
      %p90 = por %p88, %p89
      %s91 = ssub.s32 %s15, %s22
      %p92 = scmp.eq.s32.totalorder %s91, 0
      %s94 = sadd.s32 %s93, 1
      %s95 = scalar_select %p92, %s93, %s94
      %p98 = pneg %p92
      %p99 = scmp.eq.s32.totalorder %s15, 7
      %p100 = por %p98, %p99
      %p101 = scmp.ne.s32.totalorder %s93, %s96
      %p102 = scmp.eq.s32.totalorder %s15, 0
      %p103 = por %p101, %p102
      %p104 = scmp.ne.s32.totalorder %s93, %s96
      %p105 = scmp.eq.s32.totalorder %s20, 7
      %p106 = por %p104, %p105
      %p107 = scmp.ne.s32.totalorder %s96, %s97
      %p108 = scmp.eq.s32.totalorder %s20, 0
      %p109 = por %p107, %p108
      %p110 = scmp.ne.s32.totalorder %s96, %s97
      %p111 = scmp.eq.s32.totalorder %s21, 7
      %p112 = por %p110, %p111
      %p114 = scmp.ne.s32.totalorder %s97, %s113
      %p115 = scmp.eq.s32.totalorder %s21, 0
      %p116 = por %p114, %p115
      %p117 = scmp.le.s32.totalorder 1, %s15
      %p118 = scmp.lt.s32.totalorder %s15, 9
      %p119 = pnand %p117, %p118
      %p120 = pneg %p119
      // Predicated region
      $region9: #{tpu_custom_call.1} parent=5 // pred_check
        _
      $region10: #{tpu_custom_call.1} parent=5 // pred_check_branch
        %122 = sbr.rel (%p119) target = $region12
      $region11: #{tpu_custom_call.1} parent=5 // pred_region
        %s123 = ssub.s32 %s15, 1
        // Predicated region
        $region13: #{tpu_custom_call.1} parent=11 // pred_check
          %p124 = pneg %p62
        $region14: #{tpu_custom_call.1} parent=11 // pred_check_branch
          %126 = sbr.rel (%p124) target = $region16
        $region15: #{tpu_custom_call.1} parent=11 // pred_region
          _
        $region16: #{tpu_custom_call.1} parent=11 // pred_fallthru
          _
        // Predicated region
        $region17: #{tpu_custom_call.1} parent=11 // pred_check
          %p127 = pneg %p83
        $region18: #{tpu_custom_call.1} parent=11 // pred_check_branch
          %129 = sbr.rel (%p127) target = $region20
        $region19: #{tpu_custom_call.1} parent=11 // pred_region
          _
        $region20: #{tpu_custom_call.1} parent=11 // pred_fallthru
          _
      $region12: #{tpu_custom_call.1} parent=5 // pred_fallthru
        _
      %p130 = scmp.lt.s32.totalorder %s15, 8
      // Predicated region
      $region21: #{tpu_custom_call.1} parent=5 // pred_check
        %p131 = pneg %p130
      $region22: #{tpu_custom_call.1} parent=5 // pred_check_branch
        %133 = sbr.rel (%p131) target = $region24
      $region23: #{tpu_custom_call.1} parent=5 // pred_region
        // Predicated region
        $region25: #{tpu_custom_call.1} parent=23 // pred_check
          %p134 = pneg %p35
        $region26: #{tpu_custom_call.1} parent=23 // pred_check_branch
          %136 = sbr.rel (%p134) target = $region28
        $region27: #{tpu_custom_call.1} parent=23 // pred_region
          %s137 = sand.u32 %s25, 1
          %s138 = scalar_lea.sflag [#allocation3], %s137
          %s139 = sand.u32 %s25, 1
          %s140 = smul.addr %s139, 128
          %s141 = scalar_lea.vmem [#allocation2], %s140
          %s142 = smul.u32 8, %s15
          %s144 = ssub.s32 2048, 2048
          %145 = vsyncadd %s138, %s144
          %s146 = smul.addr %s142, 2
          %s147 = smul.addr %s146, 128
          %s148 = scalar_lea.hbm %s0, %s147
          %s149 = sshll.u32 %s141, 4
          %s150 = int_to_ptr.vmem [resolvable:$true] %s149
          %155 = dma.hbm_to_vmem [thread:$0]  %s148, 2048, %s150, %s138, 256, 256, 16
        $region28: #{tpu_custom_call.1} parent=23 // pred_fallthru
          _
      $region24: #{tpu_custom_call.1} parent=5 // pred_fallthru
        _
      %p156 = scmp.le.s32.totalorder 1, %s15
      %p157 = scmp.lt.s32.totalorder %s15, 9
      %p158 = pnand %p156, %p157
      %p159 = pneg %p158
      // Predicated region
      $region29: #{tpu_custom_call.1} parent=5 // pred_check
        _
      $region30: #{tpu_custom_call.1} parent=5 // pred_check_branch
        %161 = sbr.rel (%p158) target = $region32
      $region31: #{tpu_custom_call.1} parent=5 // pred_region
        %s162 = ssub.s32 %s15, 1
        %s163 = sand.u32 %s28, 1
        %s164 = scalar_lea.sflag [#allocation3], %s163
        %s165 = sand.u32 %s28, 1
        %s166 = smul.addr %s165, 128
        %s167 = scalar_lea.vmem [#allocation2], %s166
        // Predicated region
        $region33: #{tpu_custom_call.1} parent=31 // pred_check
          %p168 = pneg %p41
        $region34: #{tpu_custom_call.1} parent=31 // pred_check_branch
          %170 = sbr.rel (%p168) target = $region36
        $region35: #{tpu_custom_call.1} parent=31 // pred_region
          %171 = dma.done %s164, 2048
        $region36: #{tpu_custom_call.1} parent=31 // pred_fallthru
          _
        %s172 = sand.u32 %s28, 1
        %s173 = scalar_lea.sflag [#allocation3], %s172
        %s174 = sand.u32 %s28, 1
        %s175 = smul.addr %s174, 128
        %s176 = scalar_lea.vmem [#allocation2], %s175
        %p177 = pneg %p41
        %p178 = pneg %p38
        %p179 = pneg %p62
        %p180 = pneg %p59
        %p181 = pneg %p83
        %p182 = pneg %p80
        %p183 = pneg %p109
        %p184 = pneg %p106
        %s185 = sand.u32 %s96, 1
        %s186 = scalar_lea.sflag [#allocation4], %s185
        %s187 = sand.u32 %s96, 1
        %s188 = smul.addr %s187, 128
        %s189 = scalar_lea.vmem [#allocation5], %s188
        %s190 = smul.u32 8, %s20
        %s191 = smul.u32 8, %s20
        %v192 = vld [vmem:[%s167] sm:$0xff]
        %v193 = vld [vmem:[%s167 + $0x8] sm:$0xff]
        %v194 = vld [vmem:[%s167 + $0x10] sm:$0xff]
        %v195 = vld [vmem:[%s167 + $0x18] sm:$0xff]
        %v196 = vld [vmem:[%s167 + $0x20] sm:$0xff]
        %v197 = vld [vmem:[%s167 + $0x28] sm:$0xff]
        %v198 = vld [vmem:[%s167 + $0x30] sm:$0xff]
        %v199 = vld [vmem:[%s167 + $0x38] sm:$0xff]
        %v200 = vld [vmem:[%s167 + $0x40] sm:$0xff]
        %v201 = vld [vmem:[%s167 + $0x48] sm:$0xff]
        %v202 = vld [vmem:[%s167 + $0x50] sm:$0xff]
        %v203 = vld [vmem:[%s167 + $0x58] sm:$0xff]
        %v204 = vld [vmem:[%s167 + $0x60] sm:$0xff]
        %v205 = vld [vmem:[%s167 + $0x68] sm:$0xff]
        %v206 = vld [vmem:[%s167 + $0x70] sm:$0xff]
        %v207 = vld [vmem:[%s167 + $0x78] sm:$0xff]
        %v208 = vadd.f32 %v192, %v193
        %209 = vadd.xlane.f32.xlu0 %v208
        %v210 = vpop.xlane.xlu0 %209
        %v211 = vadd.f32 %v194, %v195
        %212 = vadd.xlane.f32.xlu0 %v211
        %v213 = vpop.xlane.xlu0 %212
        %v214 = vadd.f32 %v196, %v197
        %215 = vadd.xlane.f32.xlu0 %v214
        %v216 = vpop.xlane.xlu0 %215
        %v217 = vadd.f32 %v198, %v199
        %218 = vadd.xlane.f32.xlu0 %v217
        %v219 = vpop.xlane.xlu0 %218
        %v220 = vadd.f32 %v200, %v201
        %221 = vadd.xlane.f32.xlu0 %v220
        %v222 = vpop.xlane.xlu0 %221
        %v223 = vadd.f32 %v202, %v203
        %224 = vadd.xlane.f32.xlu0 %v223
        %v225 = vpop.xlane.xlu0 %224
        %v226 = vadd.f32 %v204, %v205
        %227 = vadd.xlane.f32.xlu0 %v226
        %v228 = vpop.xlane.xlu0 %227
        %v229 = vadd.f32 %v206, %v207
        %230 = vadd.xlane.f32.xlu0 %v229
        %v231 = vpop.xlane.xlu0 %230
        %v232 = vmul.f32 %v210, 0.00390625
        %v233 = vmul.f32 %v213, 0.00390625
        %v234 = vmul.f32 %v216, 0.00390625
        %v235 = vmul.f32 %v219, 0.00390625
        %v236 = vmul.f32 %v222, 0.00390625
        %v237 = vmul.f32 %v225, 0.00390625
        %v238 = vmul.f32 %v228, 0.00390625
        %v239 = vmul.f32 %v231, 0.00390625
        %v240 = vsub.f32 %v192, %v232
        %v241 = vsub.f32 %v193, %v232
        %v242 = vsub.f32 %v194, %v233
        %v243 = vsub.f32 %v195, %v233
        %v244 = vsub.f32 %v196, %v234
        %v245 = vsub.f32 %v197, %v234
        %v246 = vsub.f32 %v198, %v235
        %v247 = vsub.f32 %v199, %v235
        %v248 = vsub.f32 %v200, %v236
        %v249 = vsub.f32 %v201, %v236
        %v250 = vsub.f32 %v202, %v237
        %v251 = vsub.f32 %v203, %v237
        %v252 = vsub.f32 %v204, %v238
        %v253 = vsub.f32 %v205, %v238
        %v254 = vsub.f32 %v206, %v239
        %v255 = vsub.f32 %v207, %v239
        %v256 = vmul.f32 %v240, %v240
        %v257 = vmul.f32 %v241, %v241
        %v258 = vmul.f32 %v242, %v242
        %v259 = vmul.f32 %v243, %v243
        %v260 = vmul.f32 %v244, %v244
        %v261 = vmul.f32 %v245, %v245
        %v262 = vmul.f32 %v246, %v246
        %v263 = vmul.f32 %v247, %v247
        %v264 = vmul.f32 %v248, %v248
        %v265 = vmul.f32 %v249, %v249
        %v266 = vmul.f32 %v250, %v250
        %v267 = vmul.f32 %v251, %v251
        %v268 = vmul.f32 %v252, %v252
        %v269 = vmul.f32 %v253, %v253
        %v270 = vmul.f32 %v254, %v254
        %v271 = vmul.f32 %v255, %v255
        %v272 = vadd.f32 %v256, %v257
        %273 = vadd.xlane.f32.xlu0 %v272
        %v274 = vpop.xlane.xlu0 %273
        %v275 = vadd.f32 %v258, %v259
        %276 = vadd.xlane.f32.xlu0 %v275
        %v277 = vpop.xlane.xlu0 %276
        %v278 = vadd.f32 %v260, %v261
        %279 = vadd.xlane.f32.xlu0 %v278
        %v280 = vpop.xlane.xlu0 %279
        %v281 = vadd.f32 %v262, %v263
        %282 = vadd.xlane.f32.xlu0 %v281
        %v283 = vpop.xlane.xlu0 %282
        %v284 = vadd.f32 %v264, %v265
        %285 = vadd.xlane.f32.xlu0 %v284
        %v286 = vpop.xlane.xlu0 %285
        %v287 = vadd.f32 %v266, %v267
        %288 = vadd.xlane.f32.xlu0 %v287
        %v289 = vpop.xlane.xlu0 %288
        %v290 = vadd.f32 %v268, %v269
        %291 = vadd.xlane.f32.xlu0 %v290
        %v292 = vpop.xlane.xlu0 %291
        %v293 = vadd.f32 %v270, %v271
        %294 = vadd.xlane.f32.xlu0 %v293
        %v295 = vpop.xlane.xlu0 %294
        %v296 = vmul.f32 %v274, 0.003921569
        %v297 = vmul.f32 %v277, 0.003921569
        %v298 = vmul.f32 %v280, 0.003921569
        %v299 = vmul.f32 %v283, 0.003921569
        %v300 = vmul.f32 %v286, 0.003921569
        %v301 = vmul.f32 %v289, 0.003921569
        %v302 = vmul.f32 %v292, 0.003921569
        %v303 = vmul.f32 %v295, 0.003921569
        %v304 = vadd.f32 %v296, 1e-05
        %v305 = vadd.f32 %v297, 1e-05
        %v306 = vadd.f32 %v298, 1e-05
        %v307 = vadd.f32 %v299, 1e-05
        %v308 = vadd.f32 %v300, 1e-05
        %v309 = vadd.f32 %v301, 1e-05
        %v310 = vadd.f32 %v302, 1e-05
        %v311 = vadd.f32 %v303, 1e-05
        %v312 = vrsqrt.pop %v304
        %v313 = vrsqrt.pop %v305
        %v314 = vrsqrt.pop %v306
        %v315 = vrsqrt.pop %v307
        %v316 = vrsqrt.pop %v308
        %v317 = vrsqrt.pop %v309
        %v318 = vrsqrt.pop %v310
        %v319 = vrsqrt.pop %v311
        %v320 = vmul.f32 %v240, %v312
        %v321 = vmul.f32 %v241, %v312
        %v322 = vmul.f32 %v242, %v313
        %v323 = vmul.f32 %v243, %v313
        %v324 = vmul.f32 %v244, %v314
        %v325 = vmul.f32 %v245, %v314
        %v326 = vmul.f32 %v246, %v315
        %v327 = vmul.f32 %v247, %v315
        %v328 = vmul.f32 %v248, %v316
        %v329 = vmul.f32 %v249, %v316
        %v330 = vmul.f32 %v250, %v317
        %v331 = vmul.f32 %v251, %v317
        %v332 = vmul.f32 %v252, %v318
        %v333 = vmul.f32 %v253, %v318
        %v334 = vmul.f32 %v254, %v319
        %v335 = vmul.f32 %v255, %v319
        %v336 = vld [vmem:[%s1] sm:$0x3]
        %v338 = vlaneseq
        %v339 = vshrl.u32 %v338, 7
        %v340 = vsub.s32 0, %v339
        %v341 = vrot.slane %v336, %v340
        %v342 = vlaneseq
        %v343 = vshrl.u32 %v342, 7
        %v344 = vsub.s32 1, %v343
        %v345 = vrot.slane %v336, %v344
        %v348 = vmul.f32 %v320, %v341
        %v349 = vmul.f32 %v321, %v345
        %v350 = vmul.f32 %v322, %v341
        %v351 = vmul.f32 %v323, %v345
        %v352 = vmul.f32 %v324, %v341
        %v353 = vmul.f32 %v325, %v345
        %v354 = vmul.f32 %v326, %v341
        %v355 = vmul.f32 %v327, %v345
        %v356 = vmul.f32 %v328, %v341
        %v357 = vmul.f32 %v329, %v345
        %v358 = vmul.f32 %v330, %v341
        %v359 = vmul.f32 %v331, %v345
        %v360 = vmul.f32 %v332, %v341
        %v361 = vmul.f32 %v333, %v345
        %v362 = vmul.f32 %v334, %v341
        %v363 = vmul.f32 %v335, %v345
        %v364 = vld [vmem:[%s2] sm:$0x3]
        %v366 = vlaneseq
        %v367 = vshrl.u32 %v366, 7
        %v368 = vsub.s32 0, %v367
        %v369 = vrot.slane %v364, %v368
        %v370 = vlaneseq
        %v371 = vshrl.u32 %v370, 7
        %v372 = vsub.s32 1, %v371
        %v373 = vrot.slane %v364, %v372
        %v376 = vadd.f32 %v348, %v369
        %v377 = vadd.f32 %v349, %v373
        %v378 = vadd.f32 %v350, %v369
        %v379 = vadd.f32 %v351, %v373
        %v380 = vadd.f32 %v352, %v369
        %v381 = vadd.f32 %v353, %v373
        %v382 = vadd.f32 %v354, %v369
        %v383 = vadd.f32 %v355, %v373
        %v384 = vadd.f32 %v356, %v369
        %v385 = vadd.f32 %v357, %v373
        %v386 = vadd.f32 %v358, %v369
        %v387 = vadd.f32 %v359, %v373
        %v388 = vadd.f32 %v360, %v369
        %v389 = vadd.f32 %v361, %v373
        %v390 = vadd.f32 %v362, %v369
        %v391 = vadd.f32 %v363, %v373
        %392 = vst [vmem:[%s189] sm:$0xff] %v376
        %393 = vst [vmem:[%s189 + $0x8] sm:$0xff] %v377
        %394 = vst [vmem:[%s189 + $0x10] sm:$0xff] %v378
        %395 = vst [vmem:[%s189 + $0x18] sm:$0xff] %v379
        %396 = vst [vmem:[%s189 + $0x20] sm:$0xff] %v380
        %397 = vst [vmem:[%s189 + $0x28] sm:$0xff] %v381
        %398 = vst [vmem:[%s189 + $0x30] sm:$0xff] %v382
        %399 = vst [vmem:[%s189 + $0x38] sm:$0xff] %v383
        %400 = vst [vmem:[%s189 + $0x40] sm:$0xff] %v384
        %401 = vst [vmem:[%s189 + $0x48] sm:$0xff] %v385
        %402 = vst [vmem:[%s189 + $0x50] sm:$0xff] %v386
        %403 = vst [vmem:[%s189 + $0x58] sm:$0xff] %v387
        %404 = vst [vmem:[%s189 + $0x60] sm:$0xff] %v388
        %405 = vst [vmem:[%s189 + $0x68] sm:$0xff] %v389
        %406 = vst [vmem:[%s189 + $0x70] sm:$0xff] %v390
        %407 = vst [vmem:[%s189 + $0x78] sm:$0xff] %v391
        %s408 = sand.u32 %s96, 1
        %s409 = scalar_lea.sflag [#allocation4], %s408
        %s410 = sand.u32 %s96, 1
        %s411 = smul.addr %s410, 128
        %s412 = scalar_lea.vmem [#allocation5], %s411
        // Predicated region
        $region37: #{tpu_custom_call.1} parent=31 // pred_check
          %p413 = pneg %p106
        $region38: #{tpu_custom_call.1} parent=31 // pred_check_branch
          %415 = sbr.rel (%p413) target = $region40
        $region39: #{tpu_custom_call.1} parent=31 // pred_region
          %s416 = smul.u32 8, %s20
          %s418 = ssub.s32 2048, 2048
          %419 = vsyncadd %s409, %s418
          %s420 = smul.addr %s416, 2
          %s421 = smul.addr %s420, 128
          %s422 = scalar_lea.hbm %s3, %s421
          %s423 = sshll.u32 %s412, 4
          %s424 = int_to_ptr.vmem [resolvable:$true] %s423
          %429 = dma.vmem_to_hbm [thread:$0]  %s424, 2048, %s422, %s409, 256, 256, 16
        $region40: #{tpu_custom_call.1} parent=31 // pred_fallthru
          _
      $region32: #{tpu_custom_call.1} parent=5 // pred_fallthru
        _
      %p430 = scmp.le.s32.totalorder 2, %s15
      // Predicated region
      $region41: #{tpu_custom_call.1} parent=5 // pred_check
        %p431 = pneg %p430
      $region42: #{tpu_custom_call.1} parent=5 // pred_check_branch
        %433 = sbr.rel (%p431) target = $region44
      $region43: #{tpu_custom_call.1} parent=5 // pred_region
        %s434 = ssub.s32 %s15, 2
        // Predicated region
        $region45: #{tpu_custom_call.1} parent=43 // pred_check
          %p435 = pneg %p112
        $region46: #{tpu_custom_call.1} parent=43 // pred_check_branch
          %437 = sbr.rel (%p435) target = $region48
        $region47: #{tpu_custom_call.1} parent=43 // pred_region
          %s438 = sand.u32 %s97, 1
          %s439 = scalar_lea.sflag [#allocation4], %s438
          %s440 = sand.u32 %s97, 1
          %s441 = smul.addr %s440, 128
          %s442 = scalar_lea.vmem [#allocation5], %s441
          %443 = dma.done %s439, 2048
        $region48: #{tpu_custom_call.1} parent=43 // pred_fallthru
          _
      $region44: #{tpu_custom_call.1} parent=5 // pred_fallthru
        _
    $region6: #{tpu_custom_call.1} parent=1 // loop_footer
      %s19 = sadd.s32 1, %s15
    $region7: #{tpu_custom_call.1} parent=1 // loop_footer_branch
      %14 = sbr.rel target = $region3
    $region8: #{tpu_custom_call.1} parent=1 // loop_exit
      _
    %444 = vsyncpa [#allocation3], 1
    %s445 = scalar_lea.sflag [#allocation3], 1
    %446 = vsyncpa %s445, 1
    %447 = vsyncpa [#allocation4], 1
    %s448 = scalar_lea.sflag [#allocation4], 1
    %449 = vsyncpa %s448, 1

</llo_original>
